<compile_context>
chip_gen: v7x
topology: tpu7x:2x2x1
jax: 0.10.0
libtpu: 0.0.40
codegen_flags: <defaults>
</compile_context>

<pallas_src>
import math

import numpy as np
import jax
import jax.numpy as jnp
from jax.experimental import pallas as pl
from jax.experimental.pallas import tpu as pltpu

# --- deterministic "module parameters" (from __init__ signature) -------------
IMAGE_MEAN = [0.485, 0.456, 0.406]
IMAGE_STD = [0.229, 0.224, 0.225]
MIN_SIZE = 24
MAX_SIZE = 48
SIZE_DIVISIBLE = 32


def _round_up(x: int, m: int) -> int:
    return ((x + m - 1) // m) * m


def _interp_matrix(in_size: int, out_size: int) -> np.ndarray:
    """PyTorch bilinear (align_corners=False) interpolation weights, (out, in)."""
    scale = in_size / out_size  # recomputed scale (recompute_scale_factor=True)
    dst = np.arange(out_size, dtype=np.float64)
    src = np.maximum((dst + 0.5) * scale - 0.5, 0.0)
    i0 = np.minimum(np.floor(src).astype(np.int64), in_size - 1)
    i1 = np.minimum(i0 + 1, in_size - 1)
    lam = np.clip(src - i0, 0.0, 1.0)
    w = np.zeros((out_size, in_size), dtype=np.float32)
    rows = np.arange(out_size)
    np.add.at(w, (rows, i0), 1.0 - lam)
    np.add.at(w, (rows, i1), lam)
    return w


def _eval_output_size(h: int, w: int, min_size: float, max_size: float):
    im_min, im_max = float(min(h, w)), float(max(h, w))
    scale = min(min_size / im_min, max_size / im_max)
    return int(math.floor(h * scale)), int(math.floor(w * scale))


# --- Pallas kernels: normalize + per-channel resize, bf16 MXU, f32 accumulate -
def _kernel_cols_first(whi_ref, wwi_ref, mean_ref, inv_ref,
                       x_ref, wh_ref, wwt_ref, o_ref):
    # x_ref   : (1, 1, Hin_k, Win_k) bf16   one channel plane of one image
    # wh_ref  : (1, pad_h_k, Hin_k)  bf16   zero-padded row interp weights
    # wwt_ref : (1, Win_k, tile_w)   bf16   zero-padded col interp weights (transposed)
    # mean/inv: (1, 1, 1)            f32    per-channel normalization constants
    xn = (x_ref[0, 0].astype(jnp.float32) - mean_ref[0]) * inv_ref[0]
    xb = xn.astype(jnp.bfloat16)
    u = jnp.dot(xb, wwt_ref[0], preferred_element_type=jnp.float32)        # (Hin, tw)
    r = jnp.dot(wh_ref[0], u.astype(jnp.bfloat16),
                preferred_element_type=jnp.float32)                         # (pad_h, tw)
    o_ref[0, 0] = r.astype(o_ref.dtype)                                     # full-block store


def _kernel_rows_first(whi_ref, wwi_ref, mean_ref, inv_ref,
                       x_ref, wh_ref, wwt_ref, o_ref):
    xn = (x_ref[0, 0].astype(jnp.float32) - mean_ref[0]) * inv_ref[0]
    xb = xn.astype(jnp.bfloat16)
    u = jnp.dot(wh_ref[0], xb, preferred_element_type=jnp.float32)          # (pad_h, Win)
    r = jnp.dot(u.astype(jnp.bfloat16), wwt_ref[0],
                preferred_element_type=jnp.float32)                         # (pad_h, tw)
    o_ref[0, 0] = r.astype(o_ref.dtype)


def generalized_rcnn_transform_forward(
    images,
    min_size: int = MIN_SIZE,
    max_size: int = MAX_SIZE,
    image_mean=IMAGE_MEAN,
    image_std=IMAGE_STD,
    size_divisible: int = SIZE_DIVISIBLE,
    matmul_order: str = "auto",   # "auto" | "cols_first" | "rows_first"
):
    """Eval-mode forward: returns (batched NCHW tensor, list of (H, W) sizes)."""
    n = len(images)
    if n == 0:
        raise ValueError("need at least one image")
    c = int(images[0].shape[0])

    sizes = []
    for img in images:
        if img.ndim != 3:
            raise ValueError("images must be a list of 3D CHW tensors")
        if img.shape[0] != c:
            raise ValueError("all images must have the same channel count")
        _, h, w = img.shape
        sizes.append(_eval_output_size(int(h), int(w), float(min_size), float(max_size)))

    # Module-level padded batch shape, plus a lane/sublane-aligned kernel shape.
    max_h = max(s[0] for s in sizes)
    max_w = max(s[1] for s in sizes)
    pad_h = _round_up(max_h, size_divisible)
    pad_w = _round_up(max_w, size_divisible)
    pad_h_k = _round_up(pad_h, 16)                                      # sublane aligned
    pad_w_k = _round_up(pad_w, 128)                                     # lane-dense stores
    h_in_k = _round_up(max(int(img.shape[1]) for img in images), 16)
    w_in_k = _round_up(max(int(img.shape[2]) for img in images), 128)

    # Host-side matmul-order choice: contract whichever dim shrinks most first.
    cost_cols = h_in_k * w_in_k * pad_w_k + pad_h_k * h_in_k * pad_w_k
    cost_rows = pad_h_k * h_in_k * w_in_k + pad_h_k * w_in_k * pad_w_k
    if matmul_order == "auto":
        matmul_order = "cols_first" if cost_cols <= cost_rows else "rows_first"
    kernel = _kernel_cols_first if matmul_order == "cols_first" else _kernel_rows_first

    # pad_w tiling: keeps the per-step working set inside VMEM at detection
    # resolutions and adds an extra parallel axis for v7x's two TensorCores.
    tile_w = pad_w_k
    if matmul_order == "cols_first" and pad_w_k > 512:
        for cand in (512, 384, 256, 128):
            if pad_w_k % cand == 0:
                tile_w = cand
                break
    n_wt = pad_w_k // tile_w

    # Zero-padded bf16 input slab (N, C, Hin_k, Win_k). Padded pixels never
    # contribute: the interpolation weights referencing them are exactly 0.
    slabs = []
    for img in images:
        _, h, w = img.shape
        slabs.append(jnp.pad(img.astype(jnp.float32),
                             ((0, 0), (0, h_in_k - int(h)), (0, w_in_k - int(w)))))
    x = jnp.stack(slabs, axis=0).astype(jnp.bfloat16)

    # Deduplicated, pre-zero-padded interpolation weights (bf16; zeros exact).
    wh_key_to_idx, wh_mats, wh_idx_list = {}, [], []
    ww_key_to_idx, ww_mats, ww_idx_list = {}, [], []
    for img, (oh, ow) in zip(images, sizes):
        h, w = int(img.shape[1]), int(img.shape[2])
        kh = (h, oh)
        if kh not in wh_key_to_idx:
            m = np.zeros((pad_h_k, h_in_k), np.float32)
            m[:oh, :h] = _interp_matrix(h, oh)
            wh_key_to_idx[kh] = len(wh_mats)
            wh_mats.append(m)
        wh_idx_list.append(wh_key_to_idx[kh])
        kw = (w, ow)
        if kw not in ww_key_to_idx:
            m = np.zeros((w_in_k, pad_w_k), np.float32)
            m[:w, :ow] = _interp_matrix(w, ow).T
            ww_key_to_idx[kw] = len(ww_mats)
            ww_mats.append(m)
        ww_idx_list.append(ww_key_to_idx[kw])

    wh_stack = jnp.asarray(np.stack(wh_mats, axis=0), jnp.bfloat16)    # (Uh, pad_h_k, Hin_k)
    wwt_stack = jnp.asarray(np.stack(ww_mats, axis=0), jnp.bfloat16)   # (Uw, Win_k, pad_w_k)
    wh_idx = jnp.asarray(np.asarray(wh_idx_list, np.int32))
    ww_idx = jnp.asarray(np.asarray(ww_idx_list, np.int32))
    mean_arr = jnp.asarray(np.asarray(image_mean, np.float32).reshape(c, 1, 1))
    inv_arr = jnp.asarray((1.0 / np.asarray(image_std, np.float32)).reshape(c, 1, 1))

    # Advisory cost estimate (helps XLA overlap the weight uploads).
    if matmul_order == "cols_first":
        flops = 2 * n * c * (h_in_k * w_in_k + pad_h_k * h_in_k) * pad_w_k
    else:
        flops = 2 * n * c * (n_wt * pad_h_k * h_in_k * w_in_k + pad_h_k * w_in_k * pad_w_k)
    bytes_accessed = (n * c * h_in_k * w_in_k * 2          # slab
                      + n * pad_h_k * h_in_k * 2           # row weights (resident over c, t)
                      + n * c * w_in_k * pad_w_k * 2       # col weights
                      + n * c * pad_h_k * pad_w_k * 4)     # output
    cost = pl.CostEstimate(flops=int(flops), transcendentals=0,
                           bytes_accessed=int(bytes_accessed))

    # Explicit VMEM budget: double-buffered blocks + in-kernel intermediates.
    per_step = (h_in_k * w_in_k * 2 + pad_h_k * h_in_k * 2 + w_in_k * tile_w * 2
                + pad_h_k * tile_w * 4 + h_in_k * w_in_k * 4
                + max(h_in_k, pad_h_k) * max(w_in_k, tile_w) * 4)
    vmem_limit = int(min(64 * 2**20, max(16 * 2**20, 3 * per_step)))

    grid_spec = pltpu.PrefetchScalarGridSpec(
        num_scalar_prefetch=2,            # wh_idx, ww_idx (int32, SMEM)
        grid=(n, c, n_wt),
        in_specs=[
            pl.BlockSpec((1, 1, 1), lambda i, ch, t, *_: (ch, 0, 0)),          # mean[c]
            pl.BlockSpec((1, 1, 1), lambda i, ch, t, *_: (ch, 0, 0)),          # 1/std[c]
            pl.BlockSpec((1, 1, h_in_k, w_in_k),
                         lambda i, ch, t, *_: (i, ch, 0, 0)),                  # image plane
            pl.BlockSpec((1, pad_h_k, h_in_k),
                         lambda i, ch, t, whi, wwi: (whi[i], 0, 0)),           # Wh (dedup)
            pl.BlockSpec((1, w_in_k, tile_w),
                         lambda i, ch, t, whi, wwi: (wwi[i], 0, t)),           # Ww^T (dedup)
        ],
        out_specs=pl.BlockSpec((1, 1, pad_h_k, tile_w),
                               lambda i, ch, t, *_: (i, ch, 0, t)),
    )

    out = pl.pallas_call(
        kernel,
        out_shape=jax.ShapeDtypeStruct((n, c, pad_h_k, pad_w_k), jnp.float32),
        grid_spec=grid_spec,
        compiler_params=pltpu.CompilerParams(
            dimension_semantics=("parallel", "parallel", "parallel"),
            vmem_limit_bytes=vmem_limit,
        ),
        cost_estimate=cost,
    )(wh_idx, ww_idx, mean_arr, inv_arr, x, wh_stack, wwt_stack)

    # Slice the lane-aligned kernel output back to the size_divisible shape
    # (the extra rows/cols are exact zeros by construction).
    batched = out[:, :, :pad_h, :pad_w]
    return batched, sizes


# --- pure-JAX reference (correctness sanity check; module order: resize->norm)
def _reference_forward(images, sizes, pad_h, pad_w, mean, std):
    outs = []
    for img, (oh, ow) in zip(images, sizes):
        c, h, w = img.shape
        wh = jnp.asarray(_interp_matrix(h, oh))
        ww = jnp.asarray(_interp_matrix(w, ow))
        r = jnp.einsum("oh,chw,pw->cop", wh, img.astype(jnp.float32), ww)
        r = (r - mean[:, None, None]) / std[:, None, None]
        out = jnp.zeros((c, pad_h, pad_w), jnp.float32).at[:, :oh, :ow].set(r)
        outs.append(out)
    return jnp.stack(outs, axis=0)


if __name__ == "__main__":
    key = jax.random.PRNGKey(0)
    k1, k2 = jax.random.split(key)
    # two small RGB images of different sizes (values in [0, 1], like PyTorch expects)
    img0 = jax.random.uniform(k1, (3, 16, 16), jnp.float32)
    img1 = jax.random.uniform(k2, (3, 12, 20), jnp.float32)
    images = [img0, img1]

    mean = jnp.asarray(IMAGE_MEAN, jnp.float32)
    std = jnp.asarray(IMAGE_STD, jnp.float32)

    batched, image_sizes = generalized_rcnn_transform_forward(images)
    batched = jax.block_until_ready(batched)
    ref = _reference_forward(images, image_sizes,
                             batched.shape[2], batched.shape[3], mean, std)
    # bf16 pixels/weights with f32 accumulation: ~1e-2 level agreement expected.
    np.testing.assert_allclose(np.asarray(batched), np.asarray(ref),
                               rtol=3e-2, atol=3e-2)

    # exercise the second (rows-first) matmul-order code path as well
    batched2, _ = generalized_rcnn_transform_forward(images, matmul_order="rows_first")
    batched2 = jax.block_until_ready(batched2)
    np.testing.assert_allclose(np.asarray(batched2), np.asarray(ref),
                               rtol=3e-2, atol=3e-2)

    print("KERNEL_OK")
</pallas_src>

<mosaic_0001>
module attributes {stable_mosaic.version = 11 : i64} {
  func.func @_kernel_cols_first(%arg0: i32, %arg1: i32, %arg2: i32, %arg3: memref<2xi32, #tpu.memory_space<smem>>, %arg4: memref<2xi32, #tpu.memory_space<smem>>, %arg5: memref<1x1x1xf32, #tpu.memory_space<vmem>>, %arg6: memref<1x1x1xf32, #tpu.memory_space<vmem>>, %arg7: memref<1x1x16x128xbf16, #tpu.memory_space<vmem>>, %arg8: memref<1x32x16xbf16, #tpu.memory_space<vmem>>, %arg9: memref<1x128x128xbf16, #tpu.memory_space<vmem>>, %arg10: memref<1x1x32x128xf32, #tpu.memory_space<vmem>>) attributes {dimension_semantics = [#tpu.dimension_semantics<parallel>, #tpu.dimension_semantics<parallel>, #tpu.dimension_semantics<parallel>], iteration_bounds = array<i64: 2, 3, 1>, scalar_prefetch = 2 : i64, scratch_operands = 0 : i64, tpu.core_type = #tpu.core_type<tc>, window_params = [{transform_indices = @transform_0, window_bounds = array<i64: 1, 1, 1>}, {transform_indices = @transform_1, window_bounds = array<i64: 1, 1, 1>}, {transform_indices = @transform_2, window_bounds = array<i64: 1, 1, 16, 128>}, {transform_indices = @transform_3, window_bounds = array<i64: 1, 32, 16>}, {transform_indices = @transform_4, window_bounds = array<i64: 1, 128, 128>}, {transform_indices = @transform_5, window_bounds = array<i64: 1, 1, 32, 128>}]} {
    %c0 = arith.constant 0 : index
    %c0_0 = arith.constant 0 : index
    %c0_1 = arith.constant 0 : index
    %c0_2 = arith.constant 0 : index
    %0 = vector.load %arg7[%c0, %c0_0, %c0_1, %c0_2] : memref<1x1x16x128xbf16, #tpu.memory_space<vmem>>, vector<1x1x16x128xbf16>
    %1 = vector.shape_cast %0 : vector<1x1x16x128xbf16> to vector<16x128xbf16>
    %2 = arith.extf %1 : vector<16x128xbf16> to vector<16x128xf32>
    %c0_3 = arith.constant 0 : index
    %c0_4 = arith.constant 0 : index
    %c0_5 = arith.constant 0 : index
    %3 = vector.load %arg5[%c0_3, %c0_4, %c0_5] : memref<1x1x1xf32, #tpu.memory_space<vmem>>, vector<1x1x1xf32>
    %4 = vector.shape_cast %3 : vector<1x1x1xf32> to vector<1x1xf32>
    %5 = vector.broadcast %4 : vector<1x1xf32> to vector<16x128xf32>
    %6 = arith.subf %2, %5 : vector<16x128xf32>
    %c0_6 = arith.constant 0 : index
    %c0_7 = arith.constant 0 : index
    %c0_8 = arith.constant 0 : index
    %7 = vector.load %arg6[%c0_6, %c0_7, %c0_8] : memref<1x1x1xf32, #tpu.memory_space<vmem>>, vector<1x1x1xf32>
    %8 = vector.shape_cast %7 : vector<1x1x1xf32> to vector<1x1xf32>
    %9 = vector.broadcast %8 : vector<1x1xf32> to vector<16x128xf32>
    %10 = arith.mulf %6, %9 : vector<16x128xf32>
    %11 = arith.truncf %10 : vector<16x128xf32> to vector<16x128xbf16>
    %c0_9 = arith.constant 0 : index
    %c0_10 = arith.constant 0 : index
    %c0_11 = arith.constant 0 : index
    %12 = vector.load %arg9[%c0_9, %c0_10, %c0_11] : memref<1x128x128xbf16, #tpu.memory_space<vmem>>, vector<1x128x128xbf16>
    %13 = vector.shape_cast %12 : vector<1x128x128xbf16> to vector<128x128xbf16>
    %cst = arith.constant dense<0.000000e+00> : vector<16x128xf32>
    %14 = tpu.matmul %11, %13, %cst {dimension_numbers = #tpu.dot_dimension_numbers<[1], [0], [0], [1], [0, 0, 1, 1], [], []>} : vector<16x128xbf16>, vector<128x128xbf16>, vector<16x128xf32> -> vector<16x128xf32>
    %c0_12 = arith.constant 0 : index
    %c0_13 = arith.constant 0 : index
    %c0_14 = arith.constant 0 : index
    %15 = vector.load %arg8[%c0_12, %c0_13, %c0_14] : memref<1x32x16xbf16, #tpu.memory_space<vmem>>, vector<1x32x16xbf16>
    %16 = vector.shape_cast %15 : vector<1x32x16xbf16> to vector<32x16xbf16>
    %17 = arith.truncf %14 : vector<16x128xf32> to vector<16x128xbf16>
    %cst_15 = arith.constant dense<0.000000e+00> : vector<32x128xf32>
    %18 = tpu.matmul %16, %17, %cst_15 {dimension_numbers = #tpu.dot_dimension_numbers<[1], [0], [0], [1], [0, 0, 1, 1], [], []>} : vector<32x16xbf16>, vector<16x128xbf16>, vector<32x128xf32> -> vector<32x128xf32>
    %c0_16 = arith.constant 0 : index
    %c0_17 = arith.constant 0 : index
    %c0_18 = arith.constant 0 : index
    %c0_19 = arith.constant 0 : index
    %19 = vector.load %arg10[%c0_16, %c0_17, %c0_18, %c0_19] : memref<1x1x32x128xf32, #tpu.memory_space<vmem>>, vector<1x1x32x128xf32>
    %20 = vector.shape_cast %19 : vector<1x1x32x128xf32> to vector<32x128xf32>
    %21 = vector.shape_cast %18 : vector<32x128xf32> to vector<1x1x32x128xf32>
    tpu.vector_store %arg10[%c0_16, %c0_17, %c0_18, %c0_19], %21 {strides = array<i32>} : memref<1x1x32x128xf32, #tpu.memory_space<vmem>>, vector<1x1x32x128xf32>,
    return
  }
  func.func @transform_0(%arg0: i32, %arg1: i32, %arg2: i32, %arg3: memref<2xi32, #tpu.memory_space<smem>>, %arg4: memref<2xi32, #tpu.memory_space<smem>>) -> (i32, i32, i32) {
    %c0_i32 = arith.constant 0 : i32
    %c0_i32_0 = arith.constant 0 : i32
    %c0_i32_1 = arith.constant 0 : i32
    return %arg1, %c0_i32, %c0_i32_0 : i32, i32, i32
  }
  func.func @transform_1(%arg0: i32, %arg1: i32, %arg2: i32, %arg3: memref<2xi32, #tpu.memory_space<smem>>, %arg4: memref<2xi32, #tpu.memory_space<smem>>) -> (i32, i32, i32) {
    %c0_i32 = arith.constant 0 : i32
    %c0_i32_0 = arith.constant 0 : i32
    %c0_i32_1 = arith.constant 0 : i32
    return %arg1, %c0_i32, %c0_i32_0 : i32, i32, i32
  }
  func.func @transform_2(%arg0: i32, %arg1: i32, %arg2: i32, %arg3: memref<2xi32, #tpu.memory_space<smem>>, %arg4: memref<2xi32, #tpu.memory_space<smem>>) -> (i32, i32, i32, i32) {
    %c0_i32 = arith.constant 0 : i32
    %c0_i32_0 = arith.constant 0 : i32
    %c0_i32_1 = arith.constant 0 : i32
    return %arg0, %arg1, %c0_i32, %c0_i32_0 : i32, i32, i32, i32
  }
  func.func @transform_3(%arg0: i32, %arg1: i32, %arg2: i32, %arg3: memref<2xi32, #tpu.memory_space<smem>>, %arg4: memref<2xi32, #tpu.memory_space<smem>>) -> (i32, i32, i32) {
    %0 = arith.index_cast %arg0 : i32 to index
    %1 = memref.load %arg3[%0] : memref<2xi32, #tpu.memory_space<smem>>
    %c0_i32 = arith.constant 0 : i32
    %c0_i32_0 = arith.constant 0 : i32
    %c0_i32_1 = arith.constant 0 : i32
    return %1, %c0_i32, %c0_i32_0 : i32, i32, i32
  }
  func.func @transform_4(%arg0: i32, %arg1: i32, %arg2: i32, %arg3: memref<2xi32, #tpu.memory_space<smem>>, %arg4: memref<2xi32, #tpu.memory_space<smem>>) -> (i32, i32, i32) {
    %0 = arith.index_cast %arg0 : i32 to index
    %1 = memref.load %arg4[%0] : memref<2xi32, #tpu.memory_space<smem>>
    %c0_i32 = arith.constant 0 : i32
    %c0_i32_0 = arith.constant 0 : i32
    return %1, %c0_i32, %arg2 : i32, i32, i32
  }
  func.func @transform_5(%arg0: i32, %arg1: i32, %arg2: i32, %arg3: memref<2xi32, #tpu.memory_space<smem>>, %arg4: memref<2xi32, #tpu.memory_space<smem>>) -> (i32, i32, i32, i32) {
    %c0_i32 = arith.constant 0 : i32
    %c0_i32_0 = arith.constant 0 : i32
    return %arg0, %arg1, %c0_i32, %arg2 : i32, i32, i32, i32
  }
}

</mosaic_0001>

<llo_original>
// kernel: tpu_custom_call.1
$region0: #{tpu_custom_call.1}
  #allocation0 [shape = 'u32[]', space=smem, size = 0x4, offset = 0x4, fixed_abs, tag = 'smem constant byte address 0x4 - core index']
  #allocation1 [shape = 'u32[144,128]{1,0:T(1,128)}', space=vmem, size = 0x12000, scoped, tag = 'internal scratch']
  #allocation2 [shape = 's32[1]{0}', space=sflag, size = 0x4, scoped, tag = 'scoped memory for tpu_custom_call.1']
  #allocation3 [shape = 'u8[512]{0}', space=smem, size = 0x200, scoped, tag = 'prefetched SMEM operand 0']
  #allocation4 [shape = 'u8[512]{0}', space=smem, size = 0x200, scoped, tag = 'prefetched SMEM operand 1']
  %s0 = inlined_call_operand.vmem [shape: s32[2], index: 0, kind: input, shape index: {}]
  %s1 = inlined_call_operand.vmem [shape: s32[2], index: 1, kind: input, shape index: {}]
  %s2 = inlined_call_operand.vmem [shape: f32[3,1,1], index: 2, kind: input, shape index: {}]
  %s3 = inlined_call_operand.vmem [shape: f32[3,1,1], index: 3, kind: input, shape index: {}]
  %s4 = inlined_call_operand.vmem [shape: bf16[2,3,16,128], index: 4, kind: input, shape index: {}]
  %s5 = inlined_call_operand.vmem [shape: bf16[2,32,16], index: 5, kind: input, shape index: {}]
  %s6 = inlined_call_operand.hbm [shape: bf16[2,128,128], index: 6, kind: input, shape index: {}]
  %s7 = inlined_call_operand.hbm [shape: f32[2,3,32,128], index: 7, kind: output, shape index: {}]
  %s8 = sld [smem:[#allocation0]]
  $region57: #{tpu_custom_call.1} parent=0
    _
  %s10 = ssub.s32 1, %s8
  %s11 = scalar_select 0, %s10, %s8
  %s12 = sshll.u32 %s0, 4
  %s13 = int_to_ptr.vmem [resolvable:$true] %s12
  %15 = dma.vmem_to_smem %s13, 16, [#allocation3], [#allocation2]
  %s16 = sshll.u32 %s1, 4
  %s17 = int_to_ptr.vmem [resolvable:$true] %s16
  %19 = dma.vmem_to_smem %s17, 16, [#allocation4], [#allocation2]
  %20 = dma.done [#allocation2], 32
  %21 = sfence
  $region1: #{tpu_custom_call.1} parent=0
    #allocation5 [shape = 'u8[65536]{0}', space=vmem, size = 0x10000, scoped, tag = 'input window, operand 6']
    #allocation6 [shape = 's32[2]{0}', space=sflag, size = 0x8, scoped, tag = 'scoped memory for tpu_custom_call.1']
    #allocation7 [shape = 's32[2]{0}', space=sflag, size = 0x8, scoped, tag = 'scoped memory for tpu_custom_call.1']
    #allocation8 [shape = 'u8[32768]{0}', space=vmem, size = 0x8000, scoped, tag = 'output window, operand 0']
    %22 = vsyncpa [#allocation6], 0
    %s23 = scalar_lea.sflag [#allocation6], 1
    %24 = vsyncpa %s23, 0
    %25 = vsyncpa [#allocation7], 0
    %s26 = scalar_lea.sflag [#allocation7], 1
    %27 = vsyncpa %s26, 0
    loop: start=0, step=1, limit=8
    $region2: #{tpu_custom_call.1} parent=1 // loop_pre_header
      _
    $region3: #{tpu_custom_call.1} parent=1 // loop_header
      %s29 = sphi 0, %s33
      %p30 = scmp.ge.s32.totalorder %s29, 8
      %s36 = sphi 0, %s55
      %s37 = sphi 0, %s51
      %s38 = sphi 0, %s47
      %s39 = sphi 0, %s36
      %s40 = sphi 0, %s37
      %s41 = sphi 0, %s38
      %s42 = sphi 0, %s39
      %s43 = sphi 0, %s40
      %s44 = sphi 0, %s41
      %s58 = sphi 0, %s60
      %s61 = sphi 0, %s58
      %s62 = sphi 0, %s61
      %s78 = sphi 0, %s62
      %s84 = sphi 0, %s86
      %s87 = sphi 0, %s84
      %s88 = sphi 0, %s87
      %s104 = sphi 0, %s88
      %s112 = sphi 0, %s114
      %s115 = sphi 0, %s112
      %s116 = sphi 0, %s115
      %s132 = sphi 0, %s116
      %s140 = sphi 0, %s142
      %s143 = sphi 0, %s140
      %s144 = sphi 0, %s143
      %s160 = sphi 0, %s144
      %s170 = sphi 0, %s172
      %s173 = sphi 0, %s170
      %s174 = sphi 0, %s173
      %s190 = sphi 0, %s174
      %s200 = sphi 0, %s202
      %s203 = sphi 0, %s200
      %s204 = sphi 0, %s203
      %s220 = sphi 0, %s204
    $region4: #{tpu_custom_call.1} parent=1 // loop_header_branch
      %32 = sbr.rel (%p30) target = $region8
    $region5: #{tpu_custom_call.1} parent=1 // loop_body
      %s34 = ssub.s32 %s29, 1
      %s35 = ssub.s32 %s29, 2
      %s45 = sadd.s32 1, %s38
      %p46 = scmp.ge.s32.totalorder %s45, 1
      %s47 = scalar_select %p46, 0, %s45
      %s48 = sadd.s32 1, %s37
      %s49 = scalar_select %p46, %s48, %s37
      %p50 = scmp.ge.s32.totalorder %s49, 3
      %s51 = scalar_select %p50, 0, %s49
      %s52 = sadd.s32 1, %s36
      %s53 = scalar_select %p50, %s52, %s36
      %p54 = scmp.ge.s32.totalorder %s53, 2
      %s55 = scalar_select %p54, 0, %s53
      %s56 = ssub.s32 %s37, %s51
      %p57 = scmp.eq.s32.totalorder %s56, 0
      %s59 = sadd.s32 %s58, 1
      %s60 = scalar_select %p57, %s58, %s59
      %p63 = pneg %p57
      %p64 = scmp.eq.s32.totalorder %s29, 5
      %p65 = por %p63, %p64
      %p66 = scmp.ne.s32.totalorder %s58, %s61
      %p67 = scmp.eq.s32.totalorder %s29, 0
      %p68 = por %p66, %p67
      %p69 = scmp.ne.s32.totalorder %s58, %s61
      %p70 = scmp.eq.s32.totalorder %s34, 5
      %p71 = por %p69, %p70
      %p72 = scmp.ne.s32.totalorder %s61, %s62
      %p73 = scmp.eq.s32.totalorder %s34, 0
      %p74 = por %p72, %p73
      %p75 = scmp.ne.s32.totalorder %s61, %s62
      %p76 = scmp.eq.s32.totalorder %s35, 5
      %p77 = por %p75, %p76
      %p79 = scmp.ne.s32.totalorder %s62, %s78
      %p80 = scmp.eq.s32.totalorder %s35, 0
      %p81 = por %p79, %p80
      %s82 = ssub.s32 %s37, %s51
      %p83 = scmp.eq.s32.totalorder %s82, 0
      %s85 = sadd.s32 %s84, 1
      %s86 = scalar_select %p83, %s84, %s85
      %p89 = pneg %p83
      %p90 = scmp.eq.s32.totalorder %s29, 5
      %p91 = por %p89, %p90
      %p92 = scmp.ne.s32.totalorder %s84, %s87
      %p93 = scmp.eq.s32.totalorder %s29, 0
      %p94 = por %p92, %p93
      %p95 = scmp.ne.s32.totalorder %s84, %s87
      %p96 = scmp.eq.s32.totalorder %s34, 5
      %p97 = por %p95, %p96
      %p98 = scmp.ne.s32.totalorder %s87, %s88
      %p99 = scmp.eq.s32.totalorder %s34, 0
      %p100 = por %p98, %p99
      %p101 = scmp.ne.s32.totalorder %s87, %s88
      %p102 = scmp.eq.s32.totalorder %s35, 5
      %p103 = por %p101, %p102
      %p105 = scmp.ne.s32.totalorder %s88, %s104
      %p106 = scmp.eq.s32.totalorder %s35, 0
      %p107 = por %p105, %p106
      %s108 = ssub.s32 %s36, %s55
      %s109 = ssub.s32 %s37, %s51
      %s110 = sor.u32 %s108, %s109
      %p111 = scmp.eq.s32.totalorder %s110, 0
      %s113 = sadd.s32 %s112, 1
      %s114 = scalar_select %p111, %s112, %s113
      %p117 = pneg %p111
      %p118 = scmp.eq.s32.totalorder %s29, 5
      %p119 = por %p117, %p118
      %p120 = scmp.ne.s32.totalorder %s112, %s115
      %p121 = scmp.eq.s32.totalorder %s29, 0
      %p122 = por %p120, %p121
      %p123 = scmp.ne.s32.totalorder %s112, %s115
      %p124 = scmp.eq.s32.totalorder %s34, 5
      %p125 = por %p123, %p124
      %p126 = scmp.ne.s32.totalorder %s115, %s116
      %p127 = scmp.eq.s32.totalorder %s34, 0
      %p128 = por %p126, %p127
      %p129 = scmp.ne.s32.totalorder %s115, %s116
      %p130 = scmp.eq.s32.totalorder %s35, 5
      %p131 = por %p129, %p130
      %p133 = scmp.ne.s32.totalorder %s116, %s132
      %p134 = scmp.eq.s32.totalorder %s35, 0
      %p135 = por %p133, %p134
      %s136 = sld [smem:[#allocation3 + %s36]]
      %s137 = sld [smem:[#allocation3 + %s55]]
      %s138 = ssub.s32 %s136, %s137
      %p139 = scmp.eq.s32.totalorder %s138, 0
      %s141 = sadd.s32 %s140, 1
      %s142 = scalar_select %p139, %s140, %s141
      %p145 = pneg %p139
      %p146 = scmp.eq.s32.totalorder %s29, 5
      %p147 = por %p145, %p146
      %p148 = scmp.ne.s32.totalorder %s140, %s143
      %p149 = scmp.eq.s32.totalorder %s29, 0
      %p150 = por %p148, %p149
      %p151 = scmp.ne.s32.totalorder %s140, %s143
      %p152 = scmp.eq.s32.totalorder %s34, 5
      %p153 = por %p151, %p152
      %p154 = scmp.ne.s32.totalorder %s143, %s144
      %p155 = scmp.eq.s32.totalorder %s34, 0
      %p156 = por %p154, %p155
      %p157 = scmp.ne.s32.totalorder %s143, %s144
      %p158 = scmp.eq.s32.totalorder %s35, 5
      %p159 = por %p157, %p158
      %p161 = scmp.ne.s32.totalorder %s144, %s160
      %p162 = scmp.eq.s32.totalorder %s35, 0
      %p163 = por %p161, %p162
      %s164 = sld [smem:[#allocation4 + %s36]]
      %s165 = sld [smem:[#allocation4 + %s55]]
      %s166 = ssub.s32 %s164, %s165
      %s167 = ssub.s32 %s38, %s47
      %s168 = sor.u32 %s166, %s167
      %p169 = scmp.eq.s32.totalorder %s168, 0
      %s171 = sadd.s32 %s170, 1
      %s172 = scalar_select %p169, %s170, %s171
      %p175 = pneg %p169
      %p176 = scmp.eq.s32.totalorder %s29, 5
      %p177 = por %p175, %p176
      %p178 = scmp.ne.s32.totalorder %s170, %s173
      %p179 = scmp.eq.s32.totalorder %s29, 0
      %p180 = por %p178, %p179
      %p181 = scmp.ne.s32.totalorder %s170, %s173
      %p182 = scmp.eq.s32.totalorder %s34, 5
      %p183 = por %p181, %p182
      %p184 = scmp.ne.s32.totalorder %s173, %s174
      %p185 = scmp.eq.s32.totalorder %s34, 0
      %p186 = por %p184, %p185
      %p187 = scmp.ne.s32.totalorder %s173, %s174
      %p188 = scmp.eq.s32.totalorder %s35, 5
      %p189 = por %p187, %p188
      %p191 = scmp.ne.s32.totalorder %s174, %s190
      %p192 = scmp.eq.s32.totalorder %s35, 0
      %p193 = por %p191, %p192
      %s194 = ssub.s32 %s36, %s55
      %s195 = ssub.s32 %s37, %s51
      %s196 = sor.u32 %s194, %s195
      %s197 = ssub.s32 %s38, %s47
      %s198 = sor.u32 %s196, %s197
      %p199 = scmp.eq.s32.totalorder %s198, 0
      %s201 = sadd.s32 %s200, 1
      %s202 = scalar_select %p199, %s200, %s201
      %p205 = pneg %p199
      %p206 = scmp.eq.s32.totalorder %s29, 5
      %p207 = por %p205, %p206
      %p208 = scmp.ne.s32.totalorder %s200, %s203
      %p209 = scmp.eq.s32.totalorder %s29, 0
      %p210 = por %p208, %p209
      %p211 = scmp.ne.s32.totalorder %s200, %s203
      %p212 = scmp.eq.s32.totalorder %s34, 5
      %p213 = por %p211, %p212
      %p214 = scmp.ne.s32.totalorder %s203, %s204
      %p215 = scmp.eq.s32.totalorder %s34, 0
      %p216 = por %p214, %p215
      %p217 = scmp.ne.s32.totalorder %s203, %s204
      %p218 = scmp.eq.s32.totalorder %s35, 5
      %p219 = por %p217, %p218
      %p221 = scmp.ne.s32.totalorder %s204, %s220
      %p222 = scmp.eq.s32.totalorder %s35, 0
      %p223 = por %p221, %p222
      %p224 = scmp.le.s32.totalorder 1, %s29
      %p225 = scmp.lt.s32.totalorder %s29, 7
      %p226 = pnand %p224, %p225
      %p227 = pneg %p226
      // Predicated region
      $region9: #{tpu_custom_call.1} parent=5 // pred_check
        _
      $region10: #{tpu_custom_call.1} parent=5 // pred_check_branch
        %229 = sbr.rel (%p226) target = $region12
      $region11: #{tpu_custom_call.1} parent=5 // pred_region
        %s230 = ssub.s32 %s29, 1
      $region12: #{tpu_custom_call.1} parent=5 // pred_fallthru
        _
      %p231 = scmp.lt.s32.totalorder %s29, 6
      // Predicated region
      $region13: #{tpu_custom_call.1} parent=5 // pred_check
        %p232 = pneg %p231
      $region14: #{tpu_custom_call.1} parent=5 // pred_check_branch
        %234 = sbr.rel (%p232) target = $region16
      $region15: #{tpu_custom_call.1} parent=5 // pred_region
        // Predicated region
        $region17: #{tpu_custom_call.1} parent=15 // pred_check
          %p235 = pneg %p68
        $region18: #{tpu_custom_call.1} parent=15 // pred_check_branch
          %237 = sbr.rel (%p235) target = $region20
        $region19: #{tpu_custom_call.1} parent=15 // pred_region
          %p238 = scmp.lt.s32.totalorder %s37, 2
          %s239 = scalar_select %p238, %s37, 2
          %s240 = scalar_lea.vmem %s2, %s239
        $region20: #{tpu_custom_call.1} parent=15 // pred_fallthru
          _
        // Predicated region
        $region21: #{tpu_custom_call.1} parent=15 // pred_check
          %p241 = pneg %p94
        $region22: #{tpu_custom_call.1} parent=15 // pred_check_branch
          %243 = sbr.rel (%p241) target = $region24
        $region23: #{tpu_custom_call.1} parent=15 // pred_region
          %p244 = scmp.lt.s32.totalorder %s37, 2
          %s245 = scalar_select %p244, %s37, 2
          %s246 = scalar_lea.vmem %s3, %s245
        $region24: #{tpu_custom_call.1} parent=15 // pred_fallthru
          _
        // Predicated region
        $region25: #{tpu_custom_call.1} parent=15 // pred_check
          %p247 = pneg %p122
        $region26: #{tpu_custom_call.1} parent=15 // pred_check_branch
          %249 = sbr.rel (%p247) target = $region28
        $region27: #{tpu_custom_call.1} parent=15 // pred_region
          %p250 = scmp.lt.s32.totalorder %s36, 1
          %s251 = scalar_select %p250, %s36, 1
          %p252 = scmp.lt.s32.totalorder %s37, 2
          %s253 = scalar_select %p252, %s37, 2
          %s254 = smul.addr %s253, 2
          %s255 = smul.addr %s251, 6
          %s256 = sadd.s32 %s254, %s255
          %s257 = smul.addr %s256, 4
          %s258 = scalar_lea.vmem %s4, %s257
        $region28: #{tpu_custom_call.1} parent=15 // pred_fallthru
          _
        // Predicated region
        $region29: #{tpu_custom_call.1} parent=15 // pred_check
          %p259 = pneg %p150
        $region30: #{tpu_custom_call.1} parent=15 // pred_check_branch
          %261 = sbr.rel (%p259) target = $region32
        $region31: #{tpu_custom_call.1} parent=15 // pred_region
          %s262 = sld [smem:[#allocation3 + %s36]]
          %p263 = scmp.lt.s32.totalorder %s262, 1
          %s264 = scalar_select %p263, %s262, 1
          %s265 = smul.addr %s264, 4
          %s266 = smul.addr %s265, 4
          %s267 = scalar_lea.vmem %s5, %s266
          %s268 = sld [smem:[#allocation3 + %s36]]
        $region32: #{tpu_custom_call.1} parent=15 // pred_fallthru
          _
        // Predicated region
        $region33: #{tpu_custom_call.1} parent=15 // pred_check
          %p269 = pneg %p180
        $region34: #{tpu_custom_call.1} parent=15 // pred_check_branch
          %271 = sbr.rel (%p269) target = $region36
        $region35: #{tpu_custom_call.1} parent=15 // pred_region
          %s272 = sand.u32 %s170, 1
          %s273 = scalar_lea.sflag [#allocation6], %s272
          %s274 = sand.u32 %s170, 1
          %s275 = smul.addr %s274, 64
          %s276 = scalar_lea.vmem [#allocation5], %s275
          %s277 = sld [smem:[#allocation4 + %s36]]
          %s279 = ssub.s32 1024, 1024
          %280 = vsyncadd %s273, %s279
          %s281 = smul.addr %s277, 16
          %s282 = sadd.s32 %s38, %s281
          %s283 = smul.addr %s282, 64
          %s284 = scalar_lea.hbm %s6, %s283
          %s285 = sshll.u32 %s276, 4
          %s286 = int_to_ptr.vmem [resolvable:$true] %s285
          %291 = dma.hbm_to_vmem [thread:$0]  %s284, 1024, %s286, %s273, 64, 64, 4
        $region36: #{tpu_custom_call.1} parent=15 // pred_fallthru
          _
      $region16: #{tpu_custom_call.1} parent=5 // pred_fallthru
        _
      %p292 = scmp.le.s32.totalorder 1, %s29
      %p293 = scmp.lt.s32.totalorder %s29, 7
      %p294 = pnand %p292, %p293
      %p295 = pneg %p294
      // Predicated region
      $region37: #{tpu_custom_call.1} parent=5 // pred_check
        _
      $region38: #{tpu_custom_call.1} parent=5 // pred_check_branch
        %297 = sbr.rel (%p294) target = $region40
      $region39: #{tpu_custom_call.1} parent=5 // pred_region
        %s298 = ssub.s32 %s29, 1
        %s299 = sand.u32 %s173, 1
        %s300 = scalar_lea.sflag [#allocation6], %s299
        %s301 = sand.u32 %s173, 1
        %s302 = smul.addr %s301, 64
        %s303 = scalar_lea.vmem [#allocation5], %s302
        // Predicated region
        $region41: #{tpu_custom_call.1} parent=39 // pred_check
          %p304 = pneg %p186
        $region42: #{tpu_custom_call.1} parent=39 // pred_check_branch
          %306 = sbr.rel (%p304) target = $region44
        $region43: #{tpu_custom_call.1} parent=39 // pred_region
          %307 = dma.done %s300, 1024
        $region44: #{tpu_custom_call.1} parent=39 // pred_fallthru
          _
        %p308 = scmp.lt.s32.totalorder %s40, 2
        %s309 = scalar_select %p308, %s40, 2
        %s310 = scalar_lea.vmem %s2, %s309
        %p311 = pneg %p74
        %p312 = pneg %p71
        %p313 = scmp.lt.s32.totalorder %s40, 2
        %s314 = scalar_select %p313, %s40, 2
        %s315 = scalar_lea.vmem %s3, %s314
        %p316 = pneg %p100
        %p317 = pneg %p97
        %p318 = scmp.lt.s32.totalorder %s39, 1
        %s319 = scalar_select %p318, %s39, 1
        %p320 = scmp.lt.s32.totalorder %s40, 2
        %s321 = scalar_select %p320, %s40, 2
        %s322 = smul.addr %s321, 2
        %s323 = smul.addr %s319, 6
        %s324 = sadd.s32 %s322, %s323
        %s325 = smul.addr %s324, 4
        %s326 = scalar_lea.vmem %s4, %s325
        %p327 = pneg %p128
        %p328 = pneg %p125
        %s329 = sld [smem:[#allocation3 + %s39]]
        %p330 = scmp.lt.s32.totalorder %s329, 1
        %s331 = scalar_select %p330, %s329, 1
        %s332 = smul.addr %s331, 4
        %s333 = smul.addr %s332, 4
        %s334 = scalar_lea.vmem %s5, %s333
        %p335 = pneg %p156
        %p336 = pneg %p153
        %s337 = sand.u32 %s173, 1
        %s338 = scalar_lea.sflag [#allocation6], %s337
        %s339 = sand.u32 %s173, 1
        %s340 = smul.addr %s339, 64
        %s341 = scalar_lea.vmem [#allocation5], %s340
        %p342 = pneg %p186
        %p343 = pneg %p183
        %p344 = pneg %p216
        %p345 = pneg %p213
        %s346 = sand.u32 %s203, 1
        %s347 = scalar_lea.sflag [#allocation7], %s346
        %s348 = sand.u32 %s203, 1
        %s349 = smul.addr %s348, 32
        %s350 = scalar_lea.vmem [#allocation8], %s349
        %p351 = scmp.lt.s32.totalorder %s40, 2
        %s352 = scalar_select %p351, %s40, 2
        %s353 = scalar_lea.vmem %s2, %s352
        %p354 = scmp.lt.s32.totalorder %s40, 2
        %s355 = scalar_select %p354, %s40, 2
        %s356 = scalar_lea.vmem %s3, %s355
        %p357 = scmp.lt.s32.totalorder %s39, 1
        %s358 = scalar_select %p357, %s39, 1
        %p359 = scmp.lt.s32.totalorder %s40, 2
        %s360 = scalar_select %p359, %s40, 2
        %s361 = smul.addr %s360, 2
        %s362 = smul.addr %s358, 6
        %s363 = sadd.s32 %s361, %s362
        %s364 = smul.addr %s363, 4
        %s365 = scalar_lea.vmem %s4, %s364
        %s366 = sld [smem:[#allocation3 + %s39]]
        %p367 = scmp.lt.s32.totalorder %s366, 1
        %s368 = scalar_select %p367, %s366, 1
        %s369 = smul.addr %s368, 4
        %s370 = smul.addr %s369, 4
        %s371 = scalar_lea.vmem %s5, %s370
        %s372 = sld [smem:[#allocation3 + %s39]]
        %s373 = sld [smem:[#allocation4 + %s39]]
        %v375 = vld [vmem:[%s365] sm:$0xf]
        %v376 = vld [vmem:[%s365 + $0x4] sm:$0xf]
        %v377 = vunpack.c.l.bf16 %v375
        %v378 = vunpack.c.l.bf16 %v376
        %v379 = vld [vmem:[%s353] sm:$0x1]
        %v381 = vlaneseq
        %v382 = vshrl.u32 %v381, 7
        %v383 = vsub.s32 0, %v382
        %v384 = vrot.slane %v379, %v383
        %385 = vset.pattern.permute.xlu0 0
        %386 = vperm.xlu0 %385, %v384
        %v387 = vpop.permute.xlu0 %386
        %v389 = vsub.f32 %v377, %v387
        %v390 = vsub.f32 %v378, %v387
        %v391 = vld [vmem:[%s356] sm:$0x1]
        %v393 = vlaneseq
        %v394 = vshrl.u32 %v393, 7
        %v395 = vsub.s32 0, %v394
        %v396 = vrot.slane %v391, %v395
        %397 = vset.pattern.permute.xlu0 0
        %398 = vperm.xlu0 %397, %v396
        %v399 = vpop.permute.xlu0 %398
        %v401 = vmul.f32 %v389, %v399
        %v402 = vmul.f32 %v390, %v399
        %v403 = vpack.c.bf16 %v402, %v401
        %v404 = vld [vmem:[%s303] sm:$0xf]
        %v405 = vld [vmem:[%s303 + $0x4] sm:$0xf]
        %v406 = vld [vmem:[%s303 + $0x8] sm:$0xf]
        %v407 = vld [vmem:[%s303 + $0xc] sm:$0xf]
        %v408 = vld [vmem:[%s303 + $0x10] sm:$0xf]
        %v409 = vld [vmem:[%s303 + $0x14] sm:$0xf]
        %v410 = vld [vmem:[%s303 + $0x18] sm:$0xf]
        %v411 = vld [vmem:[%s303 + $0x1c] sm:$0xf]
        %v412 = vld [vmem:[%s303 + $0x20] sm:$0xf]
        %v413 = vld [vmem:[%s303 + $0x24] sm:$0xf]
        %v414 = vld [vmem:[%s303 + $0x28] sm:$0xf]
        %v415 = vld [vmem:[%s303 + $0x2c] sm:$0xf]
        %v416 = vld [vmem:[%s303 + $0x30] sm:$0xf]
        %v417 = vld [vmem:[%s303 + $0x34] sm:$0xf]
        %v418 = vld [vmem:[%s303 + $0x38] sm:$0xf]
        %v419 = vld [vmem:[%s303 + $0x3c] sm:$0xf]
        %v436 = vunpack.c.l.b16 %v404
        %v437 = vunpack.c.l.b16 %v405
        %v438 = vunpack.c.l.b16 %v406
        %v439 = vunpack.c.l.b16 %v407
        %v440 = vunpack.c.l.b16 %v408
        %v441 = vunpack.c.l.b16 %v409
        %v442 = vunpack.c.l.b16 %v410
        %v443 = vunpack.c.l.b16 %v411
        %v444 = vunpack.c.l.b16 %v412
        %v445 = vunpack.c.l.b16 %v413
        %v446 = vunpack.c.l.b16 %v414
        %v447 = vunpack.c.l.b16 %v415
        %v448 = vunpack.c.l.b16 %v416
        %v449 = vunpack.c.l.b16 %v417
        %v450 = vunpack.c.l.b16 %v418
        %v451 = vunpack.c.l.b16 %v419
        %v452 = vpack.c.b16 %v437, %v436
        %v453 = vpack.c.b16 %v439, %v438
        %v454 = vpack.c.b16 %v441, %v440
        %v455 = vpack.c.b16 %v443, %v442
        %v456 = vpack.c.b16 %v445, %v444
        %v457 = vpack.c.b16 %v447, %v446
        %v458 = vpack.c.b16 %v449, %v448
        %v459 = vpack.c.b16 %v451, %v450
        %468 = vmatprep.subr.bf16.mxu0 0
        %469 = vmatpush1.bf16.msra.mxu0 %v452
        %470 = vmatprep.subr.bf16.mxu0 0
        %471 = vmatpush1.bf16.msra.mxu0 %v453
        %472 = vmatprep.subr.bf16.mxu0 0
        %473 = vmatpush1.bf16.msra.mxu0 %v454
        %474 = vmatprep.subr.bf16.mxu0 0
        %475 = vmatpush1.bf16.msra.mxu0 %v455
        %476 = vmatprep.subr.bf16.mxu0 0
        %477 = vmatpush1.bf16.msra.mxu0 %v456
        %478 = vmatprep.subr.bf16.mxu0 0
        %479 = vmatpush1.bf16.msra.mxu0 %v457
        %480 = vmatprep.subr.bf16.mxu0 0
        %481 = vmatpush1.bf16.msra.mxu0 %v458
        %482 = vmatprep.subr.bf16.mxu0 0
        %483 = vmatpush1.bf16.msra.mxu0 %v459
        %484 = vmatprep.subr.bf16.mxu0 0
        %485 = vmatpush1.bf16.msra.mxu0 0
        %486 = vmatprep.subr.bf16.mxu0 0
        %487 = vmatpush1.bf16.msra.mxu0 0
        %488 = vmatprep.subr.bf16.mxu0 0
        %489 = vmatpush1.bf16.msra.mxu0 0
        %490 = vmatprep.subr.bf16.mxu0 0
        %491 = vmatpush1.bf16.msra.mxu0 0
        %492 = vmatprep.subr.bf16.mxu0 0
        %493 = vmatpush1.bf16.msra.mxu0 0
        %494 = vmatprep.subr.bf16.mxu0 0
        %495 = vmatpush1.bf16.msra.mxu0 0
        %496 = vmatprep.subr.bf16.mxu0 0
        %497 = vmatpush1.bf16.msra.mxu0 0
        %498 = vmatprep.subr.bf16.mxu0 0
        %499 = vmatpush1.bf16.msra.mxu0 0
        %500 = vmatprep.mubr.bf16.mxu0 0
        %501 = vmatmul.mubr.bf16.gmra.mrb[0].mxu0 %v403
        %v502 = vpop.f32.mrb[0].mxu0
        %v503 = vadd.f32 0.0, %v502
        %v504 = vpop.f32.mrb[0].mxu0
        %v505 = vpop.f32.mrb[0].mxu0
        %v506 = vadd.f32 0.0, %v505
        %v507 = vpop.f32.mrb[0].mxu0
        %508 = vdwg.mxu0
        %v509 = vld [vmem:[%s371] sm:$0xf]
        %v510 = vld [vmem:[%s371 + $0x4] sm:$0xf]
        %v511 = vld [vmem:[%s371 + $0x8] sm:$0xf]
        %v512 = vld [vmem:[%s371 + $0xc] sm:$0xf]
        %v513 = vpack.c.bf16 %v506, %v503
        %v518 = vunpack.c.l.b16 %v509
        %v519 = vunpack.c.l.b16 %v510
        %v520 = vunpack.c.l.b16 %v511
        %v521 = vunpack.c.l.b16 %v512
        %v522 = vpack.c.b16 %v519, %v518
        %v523 = vpack.c.b16 %v521, %v520
        %vm524 = vcmask 130048
        %v526 = vsel %vm524, %v522, 0
        %v529 = vsel %vm524, %v523, 0
        %531 = vmatprep.subr.bf16.mxu0 0
        %532 = vmatpush1.bf16.msra.mxu0 %v513
        %533 = vmatprep.subr.bf16.mxu0 0
        %534 = vmatpush1.bf16.msra.mxu0 0
        %535 = vmatprep.subr.bf16.mxu0 0
        %536 = vmatpush1.bf16.msra.mxu0 0
        %537 = vmatprep.subr.bf16.mxu0 0
        %538 = vmatpush1.bf16.msra.mxu0 0
        %539 = vmatprep.subr.bf16.mxu0 0
        %540 = vmatpush1.bf16.msra.mxu0 0
        %541 = vmatprep.subr.bf16.mxu0 0
        %542 = vmatpush1.bf16.msra.mxu0 0
        %543 = vmatprep.subr.bf16.mxu0 0
        %544 = vmatpush1.bf16.msra.mxu0 0
        %545 = vmatprep.subr.bf16.mxu0 0
        %546 = vmatpush1.bf16.msra.mxu0 0
        %547 = vmatprep.subr.bf16.mxu0 0
        %548 = vmatpush1.bf16.msra.mxu0 0
        %549 = vmatprep.subr.bf16.mxu0 0
        %550 = vmatpush1.bf16.msra.mxu0 0
        %551 = vmatprep.subr.bf16.mxu0 0
        %552 = vmatpush1.bf16.msra.mxu0 0
        %553 = vmatprep.subr.bf16.mxu0 0
        %554 = vmatpush1.bf16.msra.mxu0 0
        %555 = vmatprep.subr.bf16.mxu0 0
        %556 = vmatpush1.bf16.msra.mxu0 0
        %557 = vmatprep.subr.bf16.mxu0 0
        %558 = vmatpush1.bf16.msra.mxu0 0
        %559 = vmatprep.subr.bf16.mxu0 0
        %560 = vmatpush1.bf16.msra.mxu0 0
        %561 = vmatprep.subr.bf16.mxu0 0
        %562 = vmatpush1.bf16.msra.mxu0 0
        %563 = vmatprep.mubr.bf16.mxu0 0
        %564 = vmatmul.mubr.bf16.gmra.mrb[0].mxu0 %v526
        %v565 = vpop.f32.mrb[0].mxu0
        %v566 = vadd.f32 0.0, %v565
        %v567 = vpop.f32.mrb[0].mxu0
        %v568 = vpop.f32.mrb[0].mxu0
        %v569 = vadd.f32 0.0, %v568
        %v570 = vpop.f32.mrb[0].mxu0
        %571 = vmatprep.mubr.bf16.mxu0 0
        %572 = vmatmul.mubr.bf16.gmra.mrb[0].mxu0 %v529
        %v573 = vpop.f32.mrb[0].mxu0
        %v574 = vadd.f32 0.0, %v573
        %v575 = vpop.f32.mrb[0].mxu0
        %v576 = vpop.f32.mrb[0].mxu0
        %v577 = vadd.f32 0.0, %v576
        %v578 = vpop.f32.mrb[0].mxu0
        %579 = vdwg.mxu0
        %580 = vst [vmem:[%s350] sm:$0xff] %v566
        %581 = vst [vmem:[%s350 + $0x8] sm:$0xff] %v569
        %582 = vst [vmem:[%s350 + $0x10] sm:$0xff] %v574
        %583 = vst [vmem:[%s350 + $0x18] sm:$0xff] %v577
        %s584 = sand.u32 %s203, 1
        %s585 = scalar_lea.sflag [#allocation7], %s584
        %s586 = sand.u32 %s203, 1
        %s587 = smul.addr %s586, 32
        %s588 = scalar_lea.vmem [#allocation8], %s587
        // Predicated region
        $region45: #{tpu_custom_call.1} parent=39 // pred_check
          %p589 = pneg %p213
        $region46: #{tpu_custom_call.1} parent=39 // pred_check_branch
          %591 = sbr.rel (%p589) target = $region48
        $region47: #{tpu_custom_call.1} parent=39 // pred_region
          %s593 = ssub.s32 512, 512
          %594 = vsyncadd %s585, %s593
          %s595 = smul.addr %s40, 4
          %s596 = sadd.s32 %s41, %s595
          %s597 = smul.addr %s39, 12
          %s598 = sadd.s32 %s596, %s597
          %s599 = smul.addr %s598, 128
          %s600 = scalar_lea.hbm %s7, %s599
          %s601 = sshll.u32 %s588, 4
          %s602 = int_to_ptr.vmem [resolvable:$true] %s601
          %607 = dma.vmem_to_hbm [thread:$0]  %s602, 512, %s600, %s585, 128, 128, 8
        $region48: #{tpu_custom_call.1} parent=39 // pred_fallthru
          _
      $region40: #{tpu_custom_call.1} parent=5 // pred_fallthru
        _
      %p608 = scmp.le.s32.totalorder 2, %s29
      // Predicated region
      $region49: #{tpu_custom_call.1} parent=5 // pred_check
        %p609 = pneg %p608
      $region50: #{tpu_custom_call.1} parent=5 // pred_check_branch
        %611 = sbr.rel (%p609) target = $region52
      $region51: #{tpu_custom_call.1} parent=5 // pred_region
        %s612 = ssub.s32 %s29, 2
        // Predicated region
        $region53: #{tpu_custom_call.1} parent=51 // pred_check
          %p613 = pneg %p219
        $region54: #{tpu_custom_call.1} parent=51 // pred_check_branch
          %615 = sbr.rel (%p613) target = $region56
        $region55: #{tpu_custom_call.1} parent=51 // pred_region
          %s616 = sand.u32 %s204, 1
          %s617 = scalar_lea.sflag [#allocation7], %s616
          %s618 = sand.u32 %s204, 1
          %s619 = smul.addr %s618, 32
          %s620 = scalar_lea.vmem [#allocation8], %s619
          %621 = dma.done %s617, 512
        $region56: #{tpu_custom_call.1} parent=51 // pred_fallthru
          _
      $region52: #{tpu_custom_call.1} parent=5 // pred_fallthru
        _
    $region6: #{tpu_custom_call.1} parent=1 // loop_footer
      %s33 = sadd.s32 1, %s29
    $region7: #{tpu_custom_call.1} parent=1 // loop_footer_branch
      %28 = sbr.rel target = $region3
    $region8: #{tpu_custom_call.1} parent=1 // loop_exit
      _
    %622 = vsyncpa [#allocation6], 1
    %s623 = scalar_lea.sflag [#allocation6], 1
    %624 = vsyncpa %s623, 1
    %625 = vsyncpa [#allocation7], 1
    %s626 = scalar_lea.sflag [#allocation7], 1
    %627 = vsyncpa %s626, 1

</llo_original>
